<compile_context>
chip_gen: v7x
topology: tpu7x:2x2x1
jax: 0.10.0
libtpu: 0.0.40
codegen_flags: <defaults>
</compile_context>

<pallas_src>
import functools

import numpy as np
import jax
import jax.numpy as jnp
from jax.experimental import pallas as pl
from jax.experimental.pallas import tpu as pltpu


def _clustering_loss_kernel(i_ref, p_ref, out_ref, w_ref, w2_ref, *, cx, cy, nk):
    k = pl.program_id(1)
    X, Y = i_ref.shape

    # Unit-spacing forward differences with replicate-last (Neumann-zero) BC:
    # last row / last column of the difference is exactly 0, so no masks are
    # needed anywhere downstream.
    def dxf(a):   # rows (sublane axis)
        return jnp.concatenate([a[1:, :], a[-1:, :]], axis=0) - a

    def dyf(a):   # cols (lane axis)
        return jnp.concatenate([a[:, 1:], a[:, -1:]], axis=1) - a

    # Per-batch work: edge weight + accumulator init, done once (k == 0) and
    # cached in VMEM scratch for the remaining K-1 cluster steps.
    @pl.when(k == 0)
    def _():
        img = i_ref[...].astype(jnp.float32)
        gx = dxf(img) * cx            # cx = gamma * min(spacing) / spacing[0]
        gy = dyf(img) * cy            # cy = gamma * min(spacing) / spacing[1]
        w = 1.0 / (1.0 + jnp.sqrt(gx * gx + gy * gy))
        w_ref[...] = w
        w2_ref[...] = 1.0 + 2.0 * w   # reused by every cluster's denominator
        out_ref[...] = jnp.full(out_ref.shape, float(nk), jnp.float32)

    # Relaxed normalized-cut cost for cluster k of this batch element.
    p = p_ref[...].astype(jnp.float32)
    d = dxf(p) + dyf(p)
    nom = jnp.sum(p * (p + w_ref[...] * d))
    den = jnp.sum(p * w2_ref[...])    # no eps guard, deliberately matching the reference
    out_ref[...] = out_ref[...] - nom / den


def clustering_loss(input_images, spacing, label_probabilities, gamma=10.0):
    """Pallas implementation of ClusteringLoss.forward (dim=2).

    input_images:         [B, C, X, Y]  (only channel 0 is used, as in the module)
    spacing:              length-2 array-like of pixel spacings (static)
    label_probabilities:  [B, K, X, Y]
    returns a scalar float32 penalty.
    """
    B, _, X, Y = input_images.shape
    K = label_probabilities.shape[1]

    sp = np.asarray(spacing, dtype=np.float64)
    gm = float(gamma) * float(np.min(sp))
    kernel = functools.partial(
        _clustering_loss_kernel,
        cx=float(gm / sp[0]), cy=float(gm / sp[1]), nk=K)

    # VMEM budget: double-buffered native-dtype (X, Y) input blocks, two f32
    # scratch planes, ~12 live f32 (X, Y) temporaries (upcasts, shifted copies,
    # products), the double-buffered out tile, plus fixed compiler headroom.
    # Capped at 48 MiB so there is slack on v7x's 64 MiB physical VMEM.
    f32 = 4
    plane = X * Y * f32
    working = (2 * X * Y * np.dtype(input_images.dtype).itemsize
               + 2 * X * Y * np.dtype(label_probabilities.dtype).itemsize
               + 2 * plane                 # w / (1 + 2w) scratch
               + 12 * plane                # live f32 temporaries
               + 2 * 8 * 128 * f32)        # double-buffered out tile
    vmem_limit = int(min(max(working + (4 << 20), 16 << 20), 48 << 20))

    per_batch = pl.pallas_call(
        kernel,
        out_shape=jax.ShapeDtypeStruct((B, 8, 128), jnp.float32),
        grid_spec=pltpu.PrefetchScalarGridSpec(
            num_scalar_prefetch=0,
            grid=(B, K),                                       # reduction axis (K) last
            in_specs=[
                # channel 0 of the image; block index constant in k -> fetched once per b
                pl.BlockSpec((None, None, X, Y), lambda b, k: (b, 0, 0, 0)),
                # one (X, Y) probability plane per (b, k) step
                pl.BlockSpec((None, None, X, Y), lambda b, k: (b, k, 0, 0)),
            ],
            # per-batch lane-dense accumulator tile, resident across the K axis
            out_specs=pl.BlockSpec((None, 8, 128), lambda b, k: (b, 0, 0)),
            scratch_shapes=[pltpu.VMEM((X, Y), jnp.float32),   # w
                            pltpu.VMEM((X, Y), jnp.float32)],  # 1 + 2w
        ),
        compiler_params=pltpu.CompilerParams(
            dimension_semantics=("parallel", "arbitrary"),     # megacore-shardable B
            vmem_limit_bytes=vmem_limit),
    )(input_images, label_probabilities)

    return jnp.sum(per_batch[:, 0, 0])


def clustering_loss_ref(input_images, spacing, label_probabilities, gamma=10.0):
    """Pure-JAX reference (mirrors the PyTorch module exactly)."""
    img = input_images[:, 0].astype(jnp.float32)

    def sx(a):
        return jnp.concatenate([a[:, 1:, :], a[:, -1:, :]], axis=1)

    def sy(a):
        return jnp.concatenate([a[:, :, 1:], a[:, :, -1:]], axis=2)

    dix = (sx(img) - img) / float(spacing[0])
    diy = (sy(img) - img) / float(spacing[1])
    w = 1.0 / (1.0 + gamma * float(np.min(spacing)) * jnp.sqrt(dix ** 2 + diy ** 2))

    B, K = label_probabilities.shape[:2]
    total = jnp.float32(B * K)
    for k in range(K):
        p = label_probabilities[:, k].astype(jnp.float32)
        p_xp = sx(p) - p
        p_yp = sy(p) - p
        nom = jnp.sum(p * (p + w * (p_xp + p_yp)), axis=(1, 2))
        denom = jnp.sum(p * (1.0 + 2.0 * w), axis=(1, 2))
        total = total - jnp.sum(nom / denom)
    return total


if __name__ == "__main__":
    key = jax.random.PRNGKey(0)
    k_img, k_lab = jax.random.split(key)

    B, C, K, H, W = 2, 1, 4, 16, 16
    input_images = jax.random.normal(k_img, (B, C, H, W), dtype=jnp.float32)
    logits = jax.random.normal(k_lab, (B, K, H, W), dtype=jnp.float32)
    label_probabilities = jax.nn.softmax(logits, axis=1)      # valid probabilities
    spacing = np.array([1.0 / (H - 1), 1.0 / (W - 1)])
    gamma = 10.0   # params['edge_penalty_gamma'] default

    out = jax.block_until_ready(
        clustering_loss(input_images, spacing, label_probabilities, gamma))
    ref = jax.block_until_ready(
        clustering_loss_ref(input_images, spacing, label_probabilities, gamma))

    assert np.allclose(np.asarray(out), np.asarray(ref), rtol=1e-4, atol=1e-4), (out, ref)
    print("KERNEL_OK")
</pallas_src>

<mosaic_0001>
module attributes {stable_mosaic.version = 11 : i64} {
  func.func @_clustering_loss_kernel(%arg0: i32, %arg1: i32, %arg2: memref<1x1x16x16xf32, #tpu.memory_space<vmem>>, %arg3: memref<1x1x16x16xf32, #tpu.memory_space<vmem>>, %arg4: memref<1x8x128xf32, #tpu.memory_space<vmem>>, %arg5: memref<16x16xf32, #tpu.memory_space<vmem>>, %arg6: memref<16x16xf32, #tpu.memory_space<vmem>>) attributes {dimension_semantics = [#tpu.dimension_semantics<parallel>, #tpu.dimension_semantics<arbitrary>], iteration_bounds = array<i64: 2, 4>, scalar_prefetch = 0 : i64, scratch_operands = 2 : i64, tpu.core_type = #tpu.core_type<tc>, window_params = [{transform_indices = @transform_0, window_bounds = array<i64: 1, 1, 16, 16>}, {transform_indices = @transform_1, window_bounds = array<i64: 1, 1, 16, 16>}, {transform_indices = @transform_2, window_bounds = array<i64: 1, 8, 128>}]} {
    %c0_i32 = arith.constant 0 : i32
    %0 = arith.cmpi eq, %arg1, %c0_i32 : i32
    %1 = arith.extui %0 : i1 to i32
    %c0_i32_0 = arith.constant 0 : i32
    %2 = arith.cmpi ne, %1, %c0_i32_0 : i32
    scf.if %2 {
      %c0_15 = arith.constant 0 : index
      %c0_16 = arith.constant 0 : index
      %c0_17 = arith.constant 0 : index
      %c0_18 = arith.constant 0 : index
      %36 = vector.load %arg2[%c0_15, %c0_16, %c0_17, %c0_18] : memref<1x1x16x16xf32, #tpu.memory_space<vmem>>, vector<1x1x16x16xf32>
      %37 = vector.shape_cast %36 : vector<1x1x16x16xf32> to vector<16x16xf32>
      %38 = vector.extract_strided_slice %37 {offsets = [1, 0], sizes = [15, 16], strides = [1, 1]} : vector<16x16xf32> to vector<15x16xf32>
      %39 = vector.extract_strided_slice %37 {offsets = [15, 0], sizes = [1, 16], strides = [1, 1]} : vector<16x16xf32> to vector<1x16xf32>
      %40 = tpu.concatenate %38, %39 in 0 : vector<15x16xf32>, vector<1x16xf32> -> vector<16x16xf32>
      %41 = arith.subf %40, %37 : vector<16x16xf32>
      %cst_19 = arith.constant 1.000000e+01 : f32
      %42 = vector.broadcast %cst_19 : f32 to vector<16x16xf32>
      %43 = arith.mulf %41, %42 : vector<16x16xf32>
      %44 = vector.extract_strided_slice %37 {offsets = [0, 1], sizes = [16, 15], strides = [1, 1]} : vector<16x16xf32> to vector<16x15xf32>
      %45 = vector.extract_strided_slice %37 {offsets = [0, 15], sizes = [16, 1], strides = [1, 1]} : vector<16x16xf32> to vector<16x1xf32>
      %46 = tpu.concatenate %44, %45 in 1 : vector<16x15xf32>, vector<16x1xf32> -> vector<16x16xf32>
      %47 = arith.subf %46, %37 : vector<16x16xf32>
      %cst_20 = arith.constant 1.000000e+01 : f32
      %48 = vector.broadcast %cst_20 : f32 to vector<16x16xf32>
      %49 = arith.mulf %47, %48 : vector<16x16xf32>
      %50 = arith.mulf %43, %43 : vector<16x16xf32>
      %51 = arith.mulf %49, %49 : vector<16x16xf32>
      %52 = arith.addf %50, %51 : vector<16x16xf32>
      %53 = math.sqrt %52 : vector<16x16xf32>
      %cst_21 = arith.constant 1.000000e+00 : f32
      %54 = vector.broadcast %cst_21 : f32 to vector<16x16xf32>
      %55 = arith.addf %54, %53 : vector<16x16xf32>
      %cst_22 = arith.constant 1.000000e+00 : f32
      %56 = vector.broadcast %cst_22 : f32 to vector<16x16xf32>
      %57 = arith.divf %56, %55 : vector<16x16xf32>
      %c0_23 = arith.constant 0 : index
      %c0_24 = arith.constant 0 : index
      %58 = vector.load %arg5[%c0_23, %c0_24] : memref<16x16xf32, #tpu.memory_space<vmem>>, vector<16x16xf32>
      tpu.vector_store %arg5[%c0_23, %c0_24], %57 {strides = array<i32>} : memref<16x16xf32, #tpu.memory_space<vmem>>, vector<16x16xf32>,
      %cst_25 = arith.constant 2.000000e+00 : f32
      %59 = vector.broadcast %cst_25 : f32 to vector<16x16xf32>
      %60 = arith.mulf %59, %57 : vector<16x16xf32>
      %cst_26 = arith.constant 1.000000e+00 : f32
      %61 = vector.broadcast %cst_26 : f32 to vector<16x16xf32>
      %62 = arith.addf %61, %60 : vector<16x16xf32>
      %c0_27 = arith.constant 0 : index
      %c0_28 = arith.constant 0 : index
      %63 = vector.load %arg6[%c0_27, %c0_28] : memref<16x16xf32, #tpu.memory_space<vmem>>, vector<16x16xf32>
      tpu.vector_store %arg6[%c0_27, %c0_28], %62 {strides = array<i32>} : memref<16x16xf32, #tpu.memory_space<vmem>>, vector<16x16xf32>,
      %cst_29 = arith.constant 4.000000e+00 : f32
      %64 = vector.broadcast %cst_29 : f32 to vector<8x128xf32>
      %c0_30 = arith.constant 0 : index
      %c0_31 = arith.constant 0 : index
      %c0_32 = arith.constant 0 : index
      %65 = vector.load %arg4[%c0_30, %c0_31, %c0_32] : memref<1x8x128xf32, #tpu.memory_space<vmem>>, vector<1x8x128xf32>
      %66 = vector.shape_cast %65 : vector<1x8x128xf32> to vector<8x128xf32>
      %67 = vector.shape_cast %64 : vector<8x128xf32> to vector<1x8x128xf32>
      tpu.vector_store %arg4[%c0_30, %c0_31, %c0_32], %67 {strides = array<i32>} : memref<1x8x128xf32, #tpu.memory_space<vmem>>, vector<1x8x128xf32>,
    } else {
    }
    %c0 = arith.constant 0 : index
    %c0_1 = arith.constant 0 : index
    %c0_2 = arith.constant 0 : index
    %c0_3 = arith.constant 0 : index
    %3 = vector.load %arg3[%c0, %c0_1, %c0_2, %c0_3] : memref<1x1x16x16xf32, #tpu.memory_space<vmem>>, vector<1x1x16x16xf32>
    %4 = vector.shape_cast %3 : vector<1x1x16x16xf32> to vector<16x16xf32>
    %5 = vector.extract_strided_slice %4 {offsets = [1, 0], sizes = [15, 16], strides = [1, 1]} : vector<16x16xf32> to vector<15x16xf32>
    %6 = vector.extract_strided_slice %4 {offsets = [15, 0], sizes = [1, 16], strides = [1, 1]} : vector<16x16xf32> to vector<1x16xf32>
    %7 = tpu.concatenate %5, %6 in 0 : vector<15x16xf32>, vector<1x16xf32> -> vector<16x16xf32>
    %8 = arith.subf %7, %4 : vector<16x16xf32>
    %9 = vector.extract_strided_slice %4 {offsets = [0, 1], sizes = [16, 15], strides = [1, 1]} : vector<16x16xf32> to vector<16x15xf32>
    %10 = vector.extract_strided_slice %4 {offsets = [0, 15], sizes = [16, 1], strides = [1, 1]} : vector<16x16xf32> to vector<16x1xf32>
    %11 = tpu.concatenate %9, %10 in 1 : vector<16x15xf32>, vector<16x1xf32> -> vector<16x16xf32>
    %12 = arith.subf %11, %4 : vector<16x16xf32>
    %13 = arith.addf %8, %12 : vector<16x16xf32>
    %c0_4 = arith.constant 0 : index
    %c0_5 = arith.constant 0 : index
    %14 = vector.load %arg5[%c0_4, %c0_5] : memref<16x16xf32, #tpu.memory_space<vmem>>, vector<16x16xf32>
    %15 = arith.mulf %14, %13 : vector<16x16xf32>
    %16 = arith.addf %4, %15 : vector<16x16xf32>
    %17 = arith.mulf %4, %16 : vector<16x16xf32>
    %18 = vector.shape_cast %17 : vector<16x16xf32> to vector<1x16x16xf32>
    %cst = arith.constant dense<0.000000e+00> : vector<1xf32>
    %19 = vector.multi_reduction <add>, %18, %cst [1, 2] : vector<1x16x16xf32> to vector<1xf32>
    %20 = vector.shape_cast %19 : vector<1xf32> to vector<1x1x1xf32>
    %21 = vector.extract %20[0, 0, 0] : f32 from vector<1x1x1xf32>
    %c0_6 = arith.constant 0 : index
    %c0_7 = arith.constant 0 : index
    %22 = vector.load %arg6[%c0_6, %c0_7] : memref<16x16xf32, #tpu.memory_space<vmem>>, vector<16x16xf32>
    %23 = arith.mulf %4, %22 : vector<16x16xf32>
    %24 = vector.shape_cast %23 : vector<16x16xf32> to vector<1x16x16xf32>
    %cst_8 = arith.constant dense<0.000000e+00> : vector<1xf32>
    %25 = vector.multi_reduction <add>, %24, %cst_8 [1, 2] : vector<1x16x16xf32> to vector<1xf32>
    %26 = vector.shape_cast %25 : vector<1xf32> to vector<1x1x1xf32>
    %27 = vector.extract %26[0, 0, 0] : f32 from vector<1x1x1xf32>
    %c0_9 = arith.constant 0 : index
    %c0_10 = arith.constant 0 : index
    %c0_11 = arith.constant 0 : index
    %28 = vector.load %arg4[%c0_9, %c0_10, %c0_11] : memref<1x8x128xf32, #tpu.memory_space<vmem>>, vector<1x8x128xf32>
    %29 = vector.shape_cast %28 : vector<1x8x128xf32> to vector<8x128xf32>
    %30 = arith.divf %21, %27 : f32
    %31 = vector.broadcast %30 : f32 to vector<8x128xf32>
    %32 = arith.subf %29, %31 : vector<8x128xf32>
    %c0_12 = arith.constant 0 : index
    %c0_13 = arith.constant 0 : index
    %c0_14 = arith.constant 0 : index
    %33 = vector.load %arg4[%c0_12, %c0_13, %c0_14] : memref<1x8x128xf32, #tpu.memory_space<vmem>>, vector<1x8x128xf32>
    %34 = vector.shape_cast %33 : vector<1x8x128xf32> to vector<8x128xf32>
    %35 = vector.shape_cast %32 : vector<8x128xf32> to vector<1x8x128xf32>
    tpu.vector_store %arg4[%c0_12, %c0_13, %c0_14], %35 {strides = array<i32>} : memref<1x8x128xf32, #tpu.memory_space<vmem>>, vector<1x8x128xf32>,
    return
  }
  func.func @transform_0(%arg0: i32, %arg1: i32) -> (i32, i32, i32, i32) {
    %c0_i32 = arith.constant 0 : i32
    %c0_i32_0 = arith.constant 0 : i32
    %c0_i32_1 = arith.constant 0 : i32
    %c0_i32_2 = arith.constant 0 : i32
    return %arg0, %c0_i32, %c0_i32_0, %c0_i32_1 : i32, i32, i32, i32
  }
  func.func @transform_1(%arg0: i32, %arg1: i32) -> (i32, i32, i32, i32) {
    %c0_i32 = arith.constant 0 : i32
    %c0_i32_0 = arith.constant 0 : i32
    %c0_i32_1 = arith.constant 0 : i32
    return %arg0, %arg1, %c0_i32, %c0_i32_0 : i32, i32, i32, i32
  }
  func.func @transform_2(%arg0: i32, %arg1: i32) -> (i32, i32, i32) {
    %c0_i32 = arith.constant 0 : i32
    %c0_i32_0 = arith.constant 0 : i32
    %c0_i32_1 = arith.constant 0 : i32
    return %arg0, %c0_i32, %c0_i32_0 : i32, i32, i32
  }
}

</mosaic_0001>

<llo_original>
// kernel: tpu_custom_call.1
$region0: #{tpu_custom_call.1}
  #allocation0 [shape = 'u32[]', space=smem, size = 0x4, offset = 0x4, fixed_abs, tag = 'smem constant byte address 0x4 - core index']
  #allocation1 [shape = 'u32[144,128]{1,0:T(1,128)}', space=vmem, size = 0x12000, scoped, tag = 'internal scratch']
  #allocation2 [shape = 'f32[16,16]{1,0:T(8,128)}', space=vmem, size = 0x2000, scoped, tag = 'scratch operand']
  #allocation3 [shape = 'f32[16,16]{1,0:T(8,128)}', space=vmem, size = 0x2000, scoped, tag = 'scratch operand']
  %s0 = inlined_call_operand.hbm [shape: f32[2,1,16,16], index: 0, kind: input, shape index: {}]
  %s1 = inlined_call_operand.hbm [shape: f32[2,4,16,16], index: 1, kind: input, shape index: {}]
  %s2 = inlined_call_operand.hbm [shape: f32[2,8,128], index: 2, kind: output, shape index: {}]
  %s3 = sld [smem:[#allocation0]]
  $region53: #{tpu_custom_call.1} parent=0
    _
  %s5 = ssub.s32 1, %s3
  %s6 = scalar_select 0, %s5, %s3
  $region1: #{tpu_custom_call.1} parent=0
    #allocation4 [shape = 'u8[16384]{0}', space=vmem, size = 0x4000, scoped, tag = 'input window, operand 0']
    #allocation5 [shape = 's32[2]{0}', space=sflag, size = 0x8, scoped, tag = 'scoped memory for tpu_custom_call.1']
    #allocation6 [shape = 's32[2]{0}', space=sflag, size = 0x8, scoped, tag = 'scoped memory for tpu_custom_call.1']
    #allocation7 [shape = 'u8[16384]{0}', space=vmem, size = 0x4000, scoped, tag = 'input window, operand 1']
    #allocation8 [shape = 's32[2]{0}', space=sflag, size = 0x8, scoped, tag = 'scoped memory for tpu_custom_call.1']
    #allocation9 [shape = 'u8[8192]{0}', space=vmem, size = 0x2000, scoped, tag = 'output window, operand 0']
    %7 = vsyncpa [#allocation5], 0
    %s8 = scalar_lea.sflag [#allocation5], 1
    %9 = vsyncpa %s8, 0
    %10 = vsyncpa [#allocation8], 0
    %s11 = scalar_lea.sflag [#allocation8], 1
    %12 = vsyncpa %s11, 0
    %13 = vsyncpa [#allocation6], 0
    %s14 = scalar_lea.sflag [#allocation6], 1
    %15 = vsyncpa %s14, 0
    loop: start=0, step=1, limit=10
    $region2: #{tpu_custom_call.1} parent=1 // loop_pre_header
      _
    $region3: #{tpu_custom_call.1} parent=1 // loop_header
      %s17 = sphi 0, %s21
      %p18 = scmp.ge.s32.totalorder %s17, 10
      %s24 = sphi 0, %s36
      %s25 = sphi 0, %s32
      %s26 = sphi 0, %s24
      %s27 = sphi 0, %s25
      %s28 = sphi 0, %s26
      %s29 = sphi 0, %s27
      %s39 = sphi 0, %s41
      %s42 = sphi 0, %s39
      %s43 = sphi 0, %s42
      %s59 = sphi 0, %s43
      %s67 = sphi 0, %s69
      %s70 = sphi 0, %s67
      %s71 = sphi 0, %s70
      %s87 = sphi 0, %s71
      %s93 = sphi 0, %s95
      %s96 = sphi 0, %s93
      %s97 = sphi 0, %s96
      %s113 = sphi 0, %s97
    $region4: #{tpu_custom_call.1} parent=1 // loop_header_branch
      %20 = sbr.rel (%p18) target = $region8
    $region5: #{tpu_custom_call.1} parent=1 // loop_body
      %s22 = ssub.s32 %s17, 1
      %s23 = ssub.s32 %s17, 2
      %s30 = sadd.s32 1, %s25
      %p31 = scmp.ge.s32.totalorder %s30, 4
      %s32 = scalar_select %p31, 0, %s30
      %s33 = sadd.s32 1, %s24
      %s34 = scalar_select %p31, %s33, %s24
      %p35 = scmp.ge.s32.totalorder %s34, 2
      %s36 = scalar_select %p35, 0, %s34
      %s37 = ssub.s32 %s24, %s36
      %p38 = scmp.eq.s32.totalorder %s37, 0
      %s40 = sadd.s32 %s39, 1
      %s41 = scalar_select %p38, %s39, %s40
      %p44 = pneg %p38
      %p45 = scmp.eq.s32.totalorder %s17, 7
      %p46 = por %p44, %p45
      %p47 = scmp.ne.s32.totalorder %s39, %s42
      %p48 = scmp.eq.s32.totalorder %s17, 0
      %p49 = por %p47, %p48
      %p50 = scmp.ne.s32.totalorder %s39, %s42
      %p51 = scmp.eq.s32.totalorder %s22, 7
      %p52 = por %p50, %p51
      %p53 = scmp.ne.s32.totalorder %s42, %s43
      %p54 = scmp.eq.s32.totalorder %s22, 0
      %p55 = por %p53, %p54
      %p56 = scmp.ne.s32.totalorder %s42, %s43
      %p57 = scmp.eq.s32.totalorder %s23, 7
      %p58 = por %p56, %p57
      %p60 = scmp.ne.s32.totalorder %s43, %s59
      %p61 = scmp.eq.s32.totalorder %s23, 0
      %p62 = por %p60, %p61
      %s63 = ssub.s32 %s24, %s36
      %s64 = ssub.s32 %s25, %s32
      %s65 = sor.u32 %s63, %s64
      %p66 = scmp.eq.s32.totalorder %s65, 0
      %s68 = sadd.s32 %s67, 1
      %s69 = scalar_select %p66, %s67, %s68
      %p72 = pneg %p66
      %p73 = scmp.eq.s32.totalorder %s17, 7
      %p74 = por %p72, %p73
      %p75 = scmp.ne.s32.totalorder %s67, %s70
      %p76 = scmp.eq.s32.totalorder %s17, 0
      %p77 = por %p75, %p76
      %p78 = scmp.ne.s32.totalorder %s67, %s70
      %p79 = scmp.eq.s32.totalorder %s22, 7
      %p80 = por %p78, %p79
      %p81 = scmp.ne.s32.totalorder %s70, %s71
      %p82 = scmp.eq.s32.totalorder %s22, 0
      %p83 = por %p81, %p82
      %p84 = scmp.ne.s32.totalorder %s70, %s71
      %p85 = scmp.eq.s32.totalorder %s23, 7
      %p86 = por %p84, %p85
      %p88 = scmp.ne.s32.totalorder %s71, %s87
      %p89 = scmp.eq.s32.totalorder %s23, 0
      %p90 = por %p88, %p89
      %s91 = ssub.s32 %s24, %s36
      %p92 = scmp.eq.s32.totalorder %s91, 0
      %s94 = sadd.s32 %s93, 1
      %s95 = scalar_select %p92, %s93, %s94
      %p98 = pneg %p92
      %p99 = scmp.eq.s32.totalorder %s17, 7
      %p100 = por %p98, %p99
      %p101 = scmp.ne.s32.totalorder %s93, %s96
      %p102 = scmp.eq.s32.totalorder %s17, 0
      %p103 = por %p101, %p102
      %p104 = scmp.ne.s32.totalorder %s93, %s96
      %p105 = scmp.eq.s32.totalorder %s22, 7
      %p106 = por %p104, %p105
      %p107 = scmp.ne.s32.totalorder %s96, %s97
      %p108 = scmp.eq.s32.totalorder %s22, 0
      %p109 = por %p107, %p108
      %p110 = scmp.ne.s32.totalorder %s96, %s97
      %p111 = scmp.eq.s32.totalorder %s23, 7
      %p112 = por %p110, %p111
      %p114 = scmp.ne.s32.totalorder %s97, %s113
      %p115 = scmp.eq.s32.totalorder %s23, 0
      %p116 = por %p114, %p115
      %p117 = scmp.le.s32.totalorder 1, %s17
      %p118 = scmp.lt.s32.totalorder %s17, 9
      %p119 = pnand %p117, %p118
      %p120 = pneg %p119
      // Predicated region
      $region9: #{tpu_custom_call.1} parent=5 // pred_check
        _
      $region10: #{tpu_custom_call.1} parent=5 // pred_check_branch
        %122 = sbr.rel (%p119) target = $region12
      $region11: #{tpu_custom_call.1} parent=5 // pred_region
        %s123 = ssub.s32 %s17, 1
      $region12: #{tpu_custom_call.1} parent=5 // pred_fallthru
        _
      %p124 = scmp.lt.s32.totalorder %s17, 8
      // Predicated region
      $region13: #{tpu_custom_call.1} parent=5 // pred_check
        %p125 = pneg %p124
      $region14: #{tpu_custom_call.1} parent=5 // pred_check_branch
        %127 = sbr.rel (%p125) target = $region16
      $region15: #{tpu_custom_call.1} parent=5 // pred_region
        // Predicated region
        $region17: #{tpu_custom_call.1} parent=15 // pred_check
          %p128 = pneg %p49
        $region18: #{tpu_custom_call.1} parent=15 // pred_check_branch
          %130 = sbr.rel (%p128) target = $region20
        $region19: #{tpu_custom_call.1} parent=15 // pred_region
          %s131 = sand.u32 %s39, 1
          %s132 = scalar_lea.sflag [#allocation5], %s131
          %s133 = sand.u32 %s39, 1
          %s134 = smul.addr %s133, 16
          %s135 = scalar_lea.vmem [#allocation4], %s134
          %s137 = ssub.s32 256, 256
          %138 = vsyncadd %s132, %s137
          %s139 = smul.addr %s24, 2
          %s140 = smul.addr %s139, 128
          %s141 = scalar_lea.hbm %s0, %s140
          %s142 = sshll.u32 %s135, 4
          %s143 = int_to_ptr.vmem [resolvable:$true] %s142
          %148 = dma.hbm_to_vmem [thread:$0]  %s141, 256, %s143, %s132, 128, 128, 8
        $region20: #{tpu_custom_call.1} parent=15 // pred_fallthru
          _
        // Predicated region
        $region21: #{tpu_custom_call.1} parent=15 // pred_check
          %p149 = pneg %p77
        $region22: #{tpu_custom_call.1} parent=15 // pred_check_branch
          %151 = sbr.rel (%p149) target = $region24
        $region23: #{tpu_custom_call.1} parent=15 // pred_region
          %s152 = sand.u32 %s67, 1
          %s153 = scalar_lea.sflag [#allocation8], %s152
          %s154 = sand.u32 %s67, 1
          %s155 = smul.addr %s154, 16
          %s156 = scalar_lea.vmem [#allocation7], %s155
          %s158 = ssub.s32 256, 256
          %159 = vsyncadd %s153, %s158
          %s160 = smul.addr %s25, 2
          %s161 = smul.addr %s24, 8
          %s162 = sadd.s32 %s160, %s161
          %s163 = smul.addr %s162, 128
          %s164 = scalar_lea.hbm %s1, %s163
          %s165 = sshll.u32 %s156, 4
          %s166 = int_to_ptr.vmem [resolvable:$true] %s165
          %171 = dma.hbm_to_vmem [thread:$0]  %s164, 256, %s166, %s153, 128, 128, 8
        $region24: #{tpu_custom_call.1} parent=15 // pred_fallthru
          _
      $region16: #{tpu_custom_call.1} parent=5 // pred_fallthru
        _
      %p172 = scmp.le.s32.totalorder 1, %s17
      %p173 = scmp.lt.s32.totalorder %s17, 9
      %p174 = pnand %p172, %p173
      %p175 = pneg %p174
      // Predicated region
      $region25: #{tpu_custom_call.1} parent=5 // pred_check
        _
      $region26: #{tpu_custom_call.1} parent=5 // pred_check_branch
        %177 = sbr.rel (%p174) target = $region28
      $region27: #{tpu_custom_call.1} parent=5 // pred_region
        %s178 = ssub.s32 %s17, 1
        %s179 = sand.u32 %s42, 1
        %s180 = scalar_lea.sflag [#allocation5], %s179
        %s181 = sand.u32 %s42, 1
        %s182 = smul.addr %s181, 16
        %s183 = scalar_lea.vmem [#allocation4], %s182
        // Predicated region
        $region29: #{tpu_custom_call.1} parent=27 // pred_check
          %p184 = pneg %p55
        $region30: #{tpu_custom_call.1} parent=27 // pred_check_branch
          %186 = sbr.rel (%p184) target = $region32
        $region31: #{tpu_custom_call.1} parent=27 // pred_region
          %187 = dma.done %s180, 256
        $region32: #{tpu_custom_call.1} parent=27 // pred_fallthru
          _
        %s188 = sand.u32 %s70, 1
        %s189 = scalar_lea.sflag [#allocation8], %s188
        %s190 = sand.u32 %s70, 1
        %s191 = smul.addr %s190, 16
        %s192 = scalar_lea.vmem [#allocation7], %s191
        // Predicated region
        $region33: #{tpu_custom_call.1} parent=27 // pred_check
          %p193 = pneg %p83
        $region34: #{tpu_custom_call.1} parent=27 // pred_check_branch
          %195 = sbr.rel (%p193) target = $region36
        $region35: #{tpu_custom_call.1} parent=27 // pred_region
          %196 = dma.done %s189, 256
        $region36: #{tpu_custom_call.1} parent=27 // pred_fallthru
          _
        %s197 = sand.u32 %s42, 1
        %s198 = scalar_lea.sflag [#allocation5], %s197
        %s199 = sand.u32 %s42, 1
        %s200 = smul.addr %s199, 16
        %s201 = scalar_lea.vmem [#allocation4], %s200
        %p202 = pneg %p55
        %p203 = pneg %p52
        %s204 = sand.u32 %s70, 1
        %s205 = scalar_lea.sflag [#allocation8], %s204
        %s206 = sand.u32 %s70, 1
        %s207 = smul.addr %s206, 16
        %s208 = scalar_lea.vmem [#allocation7], %s207
        %p209 = pneg %p83
        %p210 = pneg %p80
        %p211 = pneg %p109
        %p212 = pneg %p106
        %s213 = sand.u32 %s96, 1
        %s214 = scalar_lea.sflag [#allocation6], %s213
        %s215 = sand.u32 %s96, 1
        %s216 = smul.addr %s215, 8
        %s217 = scalar_lea.vmem [#allocation9], %s216
        %p218 = scmp.eq.s32.totalorder %s27, 0
        // Predicated region
        $region37: #{tpu_custom_call.1} parent=27 // pred_check
          %p219 = pneg %p218
        $region38: #{tpu_custom_call.1} parent=27 // pred_check_branch
          %221 = sbr.rel (%p219) target = $region40
        $region39: #{tpu_custom_call.1} parent=27 // pred_region
          %v222 = vld [vmem:[%s183] sm:$0xff]
          %v223 = vld [vmem:[%s183 + $0x8] sm:$0xff]
          %vm226 = vcmask 1046528
          %v227 = vrot.slane %v222, 1
          %v228 = vrot.slane %v223, 1
          %v229 = vsel %vm226, %v227, %v228
          %v232 = vsel %vm226, %v228, %v223
          %v233 = vsub.f32 %v229, %v222
          %v234 = vsub.f32 %v232, %v223
          %v235 = vmul.f32 %v233, 10.0
          %v236 = vmul.f32 %v234, 10.0
          %237 = vrot.lane.b32.xlu0 %v222, 127
          %v238 = vpop.permute.xlu0 %237
          %239 = vrot.lane.b32.xlu0 %v223, 127
          %v240 = vpop.permute.xlu0 %239
          %vm243 = vcmask 121856
          %v244 = vsel %vm243, %v238, %v222
          %v245 = vsel %vm243, %v240, %v223
          %v246 = vsub.f32 %v244, %v222
          %v247 = vsub.f32 %v245, %v223
          %v248 = vmul.f32 %v246, 10.0
          %v249 = vmul.f32 %v247, 10.0
          %v250 = vmul.f32 %v235, %v235
          %v251 = vmul.f32 %v236, %v236
          %v252 = vmul.f32 %v248, %v248
          %v253 = vmul.f32 %v249, %v249
          %v254 = vadd.f32 %v250, %v252
          %v255 = vadd.f32 %v251, %v253
          %v256 = vrsqrt.pop %v254
          %v257 = vmul.f32 %v254, %v256
          %vm258 = vcmp.eq.f32.partialorder %v254, inf
          %v259 = vsel %vm258, %v254, %v257
          %vm260 = vcmp.eq.f32.partialorder %v254, 0.0
          %v261 = vand.u32 %v254, 2147483648
          %v262 = vsel %vm260, %v261, %v259
          %v263 = vrsqrt.pop %v255
          %v264 = vmul.f32 %v255, %v263
          %vm265 = vcmp.eq.f32.partialorder %v255, inf
          %v266 = vsel %vm265, %v255, %v264
          %vm267 = vcmp.eq.f32.partialorder %v255, 0.0
          %v268 = vand.u32 %v255, 2147483648
          %v269 = vsel %vm267, %v268, %v266
          %v270 = vadd.f32 %v262, 1.0
          %v271 = vadd.f32 %v269, 1.0
          %v272 = vrcp.pop %v270
          %v273 = vmul.f32 1.0, %v272
          %v274 = vrcp.pop %v271
          %v275 = vmul.f32 1.0, %v274
          %vm276 = vcmask 130048
          %277 = vst.msk [vmem:[#allocation2] sm:$0xff] %vm276, %v273
          %278 = vst.msk [vmem:[#allocation2 + $0x8] sm:$0xff] %vm276, %v275
          %v279 = vmul.f32 %v273, 2.0
          %v280 = vmul.f32 %v275, 2.0
          %v281 = vadd.f32 %v279, 1.0
          %v282 = vadd.f32 %v280, 1.0
          %283 = vst.msk [vmem:[#allocation3] sm:$0xff] %vm276, %v281
          %284 = vst.msk [vmem:[#allocation3 + $0x8] sm:$0xff] %vm276, %v282
          %285 = vst [vmem:[%s217] sm:$0xff] 4.0
        $region40: #{tpu_custom_call.1} parent=27 // pred_fallthru
          _
        %v286 = vld [vmem:[%s192] sm:$0xff]
        %v287 = vld [vmem:[%s192 + $0x8] sm:$0xff]
        %vm290 = vcmask 1046528
        %v291 = vrot.slane %v286, 1
        %v292 = vrot.slane %v287, 1
        %v293 = vsel %vm290, %v291, %v292
        %v296 = vsel %vm290, %v292, %v287
        %v297 = vsub.f32 %v293, %v286
        %v298 = vsub.f32 %v296, %v287
        %299 = vrot.lane.b32.xlu0 %v286, 127
        %v300 = vpop.permute.xlu0 %299
        %301 = vrot.lane.b32.xlu0 %v287, 127
        %v302 = vpop.permute.xlu0 %301
        %vm305 = vcmask 121856
        %v306 = vsel %vm305, %v300, %v286
        %v307 = vsel %vm305, %v302, %v287
        %v308 = vsub.f32 %v306, %v286
        %v309 = vsub.f32 %v307, %v287
        %v310 = vadd.f32 %v297, %v308
        %v311 = vadd.f32 %v298, %v309
        %v312 = vld [vmem:[#allocation2] sm:$0xff]
        %v313 = vld [vmem:[#allocation2 + $0x8] sm:$0xff]
        %v314 = vmul.f32 %v312, %v310
        %v315 = vmul.f32 %v313, %v311
        %v316 = vadd.f32 %v286, %v314
        %v317 = vadd.f32 %v287, %v315
        %v318 = vmul.f32 %v286, %v316
        %v319 = vmul.f32 %v287, %v317
        %vm320 = vcmask 130048
        %v321 = vsel %vm320, %v318, 0.0
        %v322 = vsel %vm320, %v319, 0.0
        %v323 = vadd.f32 %v321, %v322
        %324 = vadd.xlane.f32.xlu0 %v323
        %v325 = vpop.xlane.xlu0 %324
        %v326 = vrot.slane %v325, 4
        %v327 = vadd.f32 %v325, %v326
        %v328 = vrot.slane %v327, 2
        %v329 = vadd.f32 %v327, %v328
        %v330 = vrot.slane %v329, 1
        %v331 = vadd.f32 %v329, %v330
        %s332 = vtos %v331
        %v333 = vld [vmem:[#allocation3] sm:$0xff]
        %v334 = vld [vmem:[#allocation3 + $0x8] sm:$0xff]
        %v335 = vmul.f32 %v286, %v333
        %v336 = vmul.f32 %v287, %v334
        %v337 = vsel %vm320, %v335, 0.0
        %v338 = vsel %vm320, %v336, 0.0
        %v339 = vadd.f32 %v337, %v338
        %340 = vadd.xlane.f32.xlu0 %v339
        %v341 = vpop.xlane.xlu0 %340
        %v342 = vrot.slane %v341, 4
        %v343 = vadd.f32 %v341, %v342
        %v344 = vrot.slane %v343, 2
        %v345 = vadd.f32 %v343, %v344
        %v346 = vrot.slane %v345, 1
        %v347 = vadd.f32 %v345, %v346
        %s348 = vtos %v347
        %v349 = vld [vmem:[%s217] sm:$0xff]
        %v350 = vstv %s348
        %v351 = vrcp.pop %v350
        %s352 = vtos %v351
        %s353 = smul.f32 %s332, %s352
        %v354 = vstv %s353
        %v355 = vsub.f32 %v349, %v354
        %356 = vst [vmem:[%s217] sm:$0xff] %v355
        %s357 = sand.u32 %s96, 1
        %s358 = scalar_lea.sflag [#allocation6], %s357
        %s359 = sand.u32 %s96, 1
        %s360 = smul.addr %s359, 8
        %s361 = scalar_lea.vmem [#allocation9], %s360
        // Predicated region
        $region41: #{tpu_custom_call.1} parent=27 // pred_check
          %p362 = pneg %p106
        $region42: #{tpu_custom_call.1} parent=27 // pred_check_branch
          %364 = sbr.rel (%p362) target = $region44
        $region43: #{tpu_custom_call.1} parent=27 // pred_region
          %s366 = ssub.s32 128, 128
          %367 = vsyncadd %s358, %s366
          %s368 = smul.addr %s26, 128
          %s369 = scalar_lea.hbm %s2, %s368
          %s371 = sshll.u32 %s361, 4
          %s372 = int_to_ptr.vmem [resolvable:$true] %s371
          %374 = dma.vmem_to_hbm [thread:$0]  %s372, 128, %s369, %s358
        $region44: #{tpu_custom_call.1} parent=27 // pred_fallthru
          _
      $region28: #{tpu_custom_call.1} parent=5 // pred_fallthru
        _
      %p375 = scmp.le.s32.totalorder 2, %s17
      // Predicated region
      $region45: #{tpu_custom_call.1} parent=5 // pred_check
        %p376 = pneg %p375
      $region46: #{tpu_custom_call.1} parent=5 // pred_check_branch
        %378 = sbr.rel (%p376) target = $region48
      $region47: #{tpu_custom_call.1} parent=5 // pred_region
        %s379 = ssub.s32 %s17, 2
        // Predicated region
        $region49: #{tpu_custom_call.1} parent=47 // pred_check
          %p380 = pneg %p112
        $region50: #{tpu_custom_call.1} parent=47 // pred_check_branch
          %382 = sbr.rel (%p380) target = $region52
        $region51: #{tpu_custom_call.1} parent=47 // pred_region
          %s383 = sand.u32 %s97, 1
          %s384 = scalar_lea.sflag [#allocation6], %s383
          %s385 = sand.u32 %s97, 1
          %s386 = smul.addr %s385, 8
          %s387 = scalar_lea.vmem [#allocation9], %s386
          %388 = dma.done %s384, 128
        $region52: #{tpu_custom_call.1} parent=47 // pred_fallthru
          _
      $region48: #{tpu_custom_call.1} parent=5 // pred_fallthru
        _
    $region6: #{tpu_custom_call.1} parent=1 // loop_footer
      %s21 = sadd.s32 1, %s17
    $region7: #{tpu_custom_call.1} parent=1 // loop_footer_branch
      %16 = sbr.rel target = $region3
    $region8: #{tpu_custom_call.1} parent=1 // loop_exit
      _
    %389 = vsyncpa [#allocation5], 1
    %s390 = scalar_lea.sflag [#allocation5], 1
    %391 = vsyncpa %s390, 1
    %392 = vsyncpa [#allocation8], 1
    %s393 = scalar_lea.sflag [#allocation8], 1
    %394 = vsyncpa %s393, 1
    %395 = vsyncpa [#allocation6], 1
    %s396 = scalar_lea.sflag [#allocation6], 1
    %397 = vsyncpa %s396, 1

</llo_original>
